<compile_context>
chip_gen: v7x
topology: tpu7x:2x2x1
jax: 0.10.0
libtpu: 0.0.40
codegen_flags: <defaults>
</compile_context>

<pallas_src>
import functools

import jax
import jax.numpy as jnp
from jax import lax
from jax.experimental import pallas as pl
from jax.experimental.pallas import tpu as pltpu


def _conv_block_kernel(x_ref, w1_ref, s1_ref, b1_ref, w2_ref, s2_ref, b2_ref,
                       mask_ref, out_ref,
                       xpad_ref, mpad_ref, xcol_ref, mcol_ref,
                       *, width, pad):
    """One image per grid step.

    x_ref    : (1, Cin, P)        flattened NCHW input tile, P = H*W
    w1_ref   : (Cout, 9*Cin)      repacked conv1 weights, K index = (3*dy+dx)*Cin+c
    s1_ref   : (Cout, 1)          fused BN scale (conv1)
    b1_ref   : (Cout, 1)          fused BN shift (conv1, includes conv bias)
    w2_ref   : (Cout, 9*Cout)     repacked conv2 weights
    s2_ref   : (Cout, 1)
    b2_ref   : (Cout, 1)
    mask_ref : (2, P)             column-validity masks for dx=0 / dx=2 taps
    out_ref  : (1, Cout, P)
    xpad_ref : VMEM (Cin,  pad+P+pad)   halo-padded flattened input
    mpad_ref : VMEM (Cout, pad+P+pad)   halo-padded flattened mid activation
    xcol_ref : VMEM (9*Cin,  P)         im2col operand for conv1
    mcol_ref : VMEM (9*Cout, P)         im2col operand for conv2
    """
    cin = xpad_ref.shape[0]
    cout = mpad_ref.shape[0]
    npix = out_ref.shape[2]
    padw = xpad_ref.shape[1]

    # Zero only the halo columns (the interior is fully overwritten every step).
    xpad_ref[:, 0:pad] = jnp.zeros((cin, pad), jnp.float32)
    xpad_ref[:, pad + npix:padw] = jnp.zeros((cin, padw - pad - npix), jnp.float32)
    mpad_ref[:, 0:pad] = jnp.zeros((cout, pad), jnp.float32)
    mpad_ref[:, pad + npix:padw] = jnp.zeros((cout, padw - pad - npix), jnp.float32)

    # Stage the flattened input once (lane-aligned interior store).
    xpad_ref[:, pad:pad + npix] = x_ref[0]

    mask_l = mask_ref[0:1, :]   # 1.0 where w-1 >= 0  (dx == 0 taps)
    mask_r = mask_ref[1:2, :]   # 1.0 where w+1 <  W  (dx == 2 taps)

    def im2col(src_ref, col_ref, nch):
        # col[(3*dy+dx)*nch + c, p] = src[c, p + (dy-1)*W + (dx-1)]  (0 outside image)
        ml = jnp.broadcast_to(mask_l, (nch, npix))   # hoisted broadcasts
        mr = jnp.broadcast_to(mask_r, (nch, npix))
        for dy in range(3):
            for dx in range(3):
                shift = (dy - 1) * width + (dx - 1)
                piece = src_ref[:, pad + shift: pad + shift + npix]
                if dx == 0:
                    piece = piece * ml
                elif dx == 2:
                    piece = piece * mr
                k = dy * 3 + dx
                col_ref[k * nch:(k + 1) * nch, :] = piece

    # ---- conv1 (single MXU matmul, K = 9*Cin) + fused BN(eval) + ReLU ----
    im2col(xpad_ref, xcol_ref, cin)
    acc1 = jnp.dot(w1_ref[...], xcol_ref[...],
                   preferred_element_type=jnp.float32)          # (Cout, P)
    y1 = jnp.maximum(acc1 * s1_ref[...] + b1_ref[...], 0.0)

    # Stage mid activation (halo already zero, only interior written).
    mpad_ref[:, pad:pad + npix] = y1

    # ---- conv2 (single MXU matmul, K = 9*Cout) + fused BN(eval) + ReLU ----
    im2col(mpad_ref, mcol_ref, cout)
    acc2 = jnp.dot(w2_ref[...], mcol_ref[...],
                   preferred_element_type=jnp.float32)          # (Cout, P)
    y2 = jnp.maximum(acc2 * s2_ref[...] + b2_ref[...], 0.0)

    out_ref[0] = y2.astype(out_ref.dtype)


@jax.jit
def conv_block_pallas(x_nchw, w1, scale1, shift1, w2, scale2, shift2):
    """x_nchw: (B, Cin, H, W) f32.  w*: (3,3,in,out) HWIO.  scale*/shift*: (Cout,).

    Returns (B, Cout, H, W) f32.
    """
    B, Cin, H, W = x_nchw.shape
    Cout = w1.shape[-1]
    P = H * W
    # Halo (in flattened pixels) must cover the largest tap shift W+1; round to a
    # lane multiple so the big interior stores stay 128-aligned.
    pad = ((W + 1 + 127) // 128) * 128
    padw = pad + P + pad

    # Free row-major reshape -- no transpose, no jnp.pad on the activations.
    x_flat = x_nchw.reshape(B, Cin, P)

    # One-time weight repack: (3,3,ci,co) -> (co, 9*ci), K index = (3*dy+dx)*ci + c.
    w1r = jnp.transpose(w1, (3, 0, 1, 2)).reshape(Cout, 9 * Cin)
    w2r = jnp.transpose(w2, (3, 0, 1, 2)).reshape(Cout, 9 * Cout)

    s1 = scale1.reshape(Cout, 1)
    t1 = shift1.reshape(Cout, 1)
    s2 = scale2.reshape(Cout, 1)
    t2 = shift2.reshape(Cout, 1)

    # Column-validity masks for the left/right taps (handle the W wrap-around of
    # the flattened-pixel shift); rows out of range fall into the zero halo.
    col = jnp.arange(P, dtype=jnp.int32) % W
    masks = jnp.stack([(col >= 1).astype(jnp.float32),
                       (col <= W - 2).astype(jnp.float32)], axis=0)    # (2, P)

    def full2d(r, c):
        return pl.BlockSpec((r, c), lambda b: (0, 0))

    out_flat = pl.pallas_call(
        functools.partial(_conv_block_kernel, width=W, pad=pad),
        out_shape=jax.ShapeDtypeStruct((B, Cout, P), jnp.float32),
        grid_spec=pltpu.PrefetchScalarGridSpec(
            num_scalar_prefetch=0,
            grid=(B,),
            in_specs=[
                pl.BlockSpec((1, Cin, P), lambda b: (b, 0, 0)),
                full2d(Cout, 9 * Cin),
                full2d(Cout, 1),
                full2d(Cout, 1),
                full2d(Cout, 9 * Cout),
                full2d(Cout, 1),
                full2d(Cout, 1),
                full2d(2, P),
            ],
            out_specs=pl.BlockSpec((1, Cout, P), lambda b: (b, 0, 0)),
            scratch_shapes=[
                pltpu.VMEM((Cin, padw), jnp.float32),
                pltpu.VMEM((Cout, padw), jnp.float32),
                pltpu.VMEM((9 * Cin, P), jnp.float32),
                pltpu.VMEM((9 * Cout, P), jnp.float32),
            ],
        ),
        compiler_params=pltpu.CompilerParams(
            dimension_semantics=("parallel",)),
    )(x_flat, w1r, s1, t1, w2r, s2, t2, masks)

    # Free reshape back to NCHW.
    return out_flat.reshape(B, Cout, H, W)


def _fold_bn(conv_bias, gamma, beta, running_mean, running_var, eps=1e-5):
    scale = gamma / jnp.sqrt(running_var + eps)
    shift = (conv_bias - running_mean) * scale + beta
    return scale, shift


def _reference(x_nchw, w1, scale1, shift1, w2, scale2, shift2):
    """Pure-JAX reference (NHWC conv via lax) for validation."""
    x = jnp.transpose(x_nchw, (0, 2, 3, 1))
    dn = lax.conv_dimension_numbers(x.shape, w1.shape, ("NHWC", "HWIO", "NHWC"))
    y = lax.conv_general_dilated(x, w1, (1, 1), "SAME", dimension_numbers=dn)
    y = jnp.maximum(y * scale1 + shift1, 0.0)
    dn2 = lax.conv_dimension_numbers(y.shape, w2.shape, ("NHWC", "HWIO", "NHWC"))
    y = lax.conv_general_dilated(y, w2, (1, 1), "SAME", dimension_numbers=dn2)
    y = jnp.maximum(y * scale2 + shift2, 0.0)
    return jnp.transpose(y, (0, 3, 1, 2))


if __name__ == "__main__":
    B, Cin, Cout, H, W = 2, 4, 8, 16, 16

    key = jax.random.PRNGKey(0)
    k_x, k_w1, k_b1, k_w2, k_b2 = jax.random.split(key, 5)

    x = jax.random.normal(k_x, (B, Cin, H, W), jnp.float32)

    # Conv weights in HWIO layout (kh, kw, in, out), deterministic init.
    w1 = jax.random.normal(k_w1, (3, 3, Cin, Cout), jnp.float32) * 0.1
    b1 = jax.random.normal(k_b1, (Cout,), jnp.float32) * 0.1
    w2 = jax.random.normal(k_w2, (3, 3, Cout, Cout), jnp.float32) * 0.1
    b2 = jax.random.normal(k_b2, (Cout,), jnp.float32) * 0.1

    # Fresh BatchNorm parameters (eval mode): gamma=1, beta=0, mean=0, var=1.
    ones = jnp.ones((Cout,), jnp.float32)
    zeros = jnp.zeros((Cout,), jnp.float32)
    scale1, shift1 = _fold_bn(b1, ones, zeros, zeros, ones)
    scale2, shift2 = _fold_bn(b2, ones, zeros, zeros, ones)

    out = conv_block_pallas(x, w1, scale1, shift1, w2, scale2, shift2)
    out = jax.block_until_ready(out)

    ref = _reference(x, w1, scale1, shift1, w2, scale2, shift2)
    assert out.shape == (B, Cout, H, W)
    assert jnp.allclose(out, ref, atol=2e-3, rtol=2e-3), "mismatch vs reference"

    print("KERNEL_OK")
</pallas_src>

<mosaic_0001>
module attributes {stable_mosaic.version = 11 : i64} {
  func.func @_conv_block_kernel(%arg0: i32, %arg1: memref<1x4x256xf32, #tpu.memory_space<vmem>>, %arg2: memref<8x36xf32, #tpu.memory_space<vmem>>, %arg3: memref<8x1xf32, #tpu.memory_space<vmem>>, %arg4: memref<8x1xf32, #tpu.memory_space<vmem>>, %arg5: memref<8x72xf32, #tpu.memory_space<vmem>>, %arg6: memref<8x1xf32, #tpu.memory_space<vmem>>, %arg7: memref<8x1xf32, #tpu.memory_space<vmem>>, %arg8: memref<2x256xf32, #tpu.memory_space<vmem>>, %arg9: memref<1x8x256xf32, #tpu.memory_space<vmem>>, %arg10: memref<4x512xf32, #tpu.memory_space<vmem>>, %arg11: memref<8x512xf32, #tpu.memory_space<vmem>>, %arg12: memref<36x256xf32, #tpu.memory_space<vmem>>, %arg13: memref<72x256xf32, #tpu.memory_space<vmem>>) attributes {dimension_semantics = [#tpu.dimension_semantics<parallel>], iteration_bounds = array<i64: 2>, scalar_prefetch = 0 : i64, scratch_operands = 4 : i64, tpu.core_type = #tpu.core_type<tc>, window_params = [{transform_indices = @transform_0, window_bounds = array<i64: 1, 4, 256>}, {pipeline_mode = #tpu.pipeline_mode<synchronous>, transform_indices = @transform_1, window_bounds = array<i64: 8, 36>}, {pipeline_mode = #tpu.pipeline_mode<synchronous>, transform_indices = @transform_2, window_bounds = array<i64: 8, 1>}, {pipeline_mode = #tpu.pipeline_mode<synchronous>, transform_indices = @transform_3, window_bounds = array<i64: 8, 1>}, {pipeline_mode = #tpu.pipeline_mode<synchronous>, transform_indices = @transform_4, window_bounds = array<i64: 8, 72>}, {pipeline_mode = #tpu.pipeline_mode<synchronous>, transform_indices = @transform_5, window_bounds = array<i64: 8, 1>}, {pipeline_mode = #tpu.pipeline_mode<synchronous>, transform_indices = @transform_6, window_bounds = array<i64: 8, 1>}, {pipeline_mode = #tpu.pipeline_mode<synchronous>, transform_indices = @transform_7, window_bounds = array<i64: 2, 256>}, {transform_indices = @transform_8, window_bounds = array<i64: 1, 8, 256>}]} {
    %cst = arith.constant 0.000000e+00 : f32
    %0 = vector.broadcast %cst : f32 to vector<4x128xf32>
    %c0 = arith.constant 0 : index
    %c0_0 = arith.constant 0 : index
    %1 = vector.load %arg10[%c0, %c0_0] : memref<4x512xf32, #tpu.memory_space<vmem>>, vector<4x128xf32>
    tpu.vector_store %arg10[%c0, %c0_0], %0 {strides = array<i32>} : memref<4x512xf32, #tpu.memory_space<vmem>>, vector<4x128xf32>,
    %cst_1 = arith.constant 0.000000e+00 : f32
    %2 = vector.broadcast %cst_1 : f32 to vector<4x128xf32>
    %c0_2 = arith.constant 0 : index
    %c384 = arith.constant 384 : index
    %3 = vector.load %arg10[%c0_2, %c384] : memref<4x512xf32, #tpu.memory_space<vmem>>, vector<4x128xf32>
    tpu.vector_store %arg10[%c0_2, %c384], %2 {strides = array<i32>} : memref<4x512xf32, #tpu.memory_space<vmem>>, vector<4x128xf32>,
    %cst_3 = arith.constant 0.000000e+00 : f32
    %4 = vector.broadcast %cst_3 : f32 to vector<8x128xf32>
    %c0_4 = arith.constant 0 : index
    %c0_5 = arith.constant 0 : index
    %5 = vector.load %arg11[%c0_4, %c0_5] : memref<8x512xf32, #tpu.memory_space<vmem>>, vector<8x128xf32>
    tpu.vector_store %arg11[%c0_4, %c0_5], %4 {strides = array<i32>} : memref<8x512xf32, #tpu.memory_space<vmem>>, vector<8x128xf32>,
    %cst_6 = arith.constant 0.000000e+00 : f32
    %6 = vector.broadcast %cst_6 : f32 to vector<8x128xf32>
    %c0_7 = arith.constant 0 : index
    %c384_8 = arith.constant 384 : index
    %7 = vector.load %arg11[%c0_7, %c384_8] : memref<8x512xf32, #tpu.memory_space<vmem>>, vector<8x128xf32>
    tpu.vector_store %arg11[%c0_7, %c384_8], %6 {strides = array<i32>} : memref<8x512xf32, #tpu.memory_space<vmem>>, vector<8x128xf32>,
    %c0_9 = arith.constant 0 : index
    %c0_10 = arith.constant 0 : index
    %c0_11 = arith.constant 0 : index
    %8 = vector.load %arg1[%c0_9, %c0_10, %c0_11] : memref<1x4x256xf32, #tpu.memory_space<vmem>>, vector<1x4x256xf32>
    %9 = vector.shape_cast %8 : vector<1x4x256xf32> to vector<4x256xf32>
    %c0_12 = arith.constant 0 : index
    %c128 = arith.constant 128 : index
    %10 = vector.load %arg10[%c0_12, %c128] : memref<4x512xf32, #tpu.memory_space<vmem>>, vector<4x256xf32>
    tpu.vector_store %arg10[%c0_12, %c128], %9 {strides = array<i32>} : memref<4x512xf32, #tpu.memory_space<vmem>>, vector<4x256xf32>,
    %c0_13 = arith.constant 0 : index
    %c0_14 = arith.constant 0 : index
    %11 = vector.load %arg8[%c0_13, %c0_14] : memref<2x256xf32, #tpu.memory_space<vmem>>, vector<1x256xf32>
    %c1 = arith.constant 1 : index
    %c0_15 = arith.constant 0 : index
    %12 = vector.load %arg8[%c1, %c0_15] : memref<2x256xf32, #tpu.memory_space<vmem>>, vector<1x256xf32>
    %13 = vector.shape_cast %11 : vector<1x256xf32> to vector<1x256xf32>
    %14 = vector.broadcast %13 : vector<1x256xf32> to vector<4x256xf32>
    %15 = vector.shape_cast %12 : vector<1x256xf32> to vector<1x256xf32>
    %16 = vector.broadcast %15 : vector<1x256xf32> to vector<4x256xf32>
    %c0_16 = arith.constant 0 : index
    %c111 = arith.constant 111 : index
    %17 = vector.load %arg10[%c0_16, %c111] : memref<4x512xf32, #tpu.memory_space<vmem>>, vector<4x256xf32>
    %18 = arith.mulf %17, %14 : vector<4x256xf32>
    %c0_17 = arith.constant 0 : index
    %c0_18 = arith.constant 0 : index
    %19 = vector.load %arg12[%c0_17, %c0_18] : memref<36x256xf32, #tpu.memory_space<vmem>>, vector<4x256xf32>
    tpu.vector_store %arg12[%c0_17, %c0_18], %18 {strides = array<i32>} : memref<36x256xf32, #tpu.memory_space<vmem>>, vector<4x256xf32>,
    %c0_19 = arith.constant 0 : index
    %c112 = arith.constant 112 : index
    %20 = vector.load %arg10[%c0_19, %c112] : memref<4x512xf32, #tpu.memory_space<vmem>>, vector<4x256xf32>
    %c4 = arith.constant 4 : index
    %c0_20 = arith.constant 0 : index
    %21 = vector.load %arg12[%c4, %c0_20] : memref<36x256xf32, #tpu.memory_space<vmem>>, vector<4x256xf32>
    tpu.vector_store %arg12[%c4, %c0_20], %20 {strides = array<i32>} : memref<36x256xf32, #tpu.memory_space<vmem>>, vector<4x256xf32>,
    %c0_21 = arith.constant 0 : index
    %c113 = arith.constant 113 : index
    %22 = vector.load %arg10[%c0_21, %c113] : memref<4x512xf32, #tpu.memory_space<vmem>>, vector<4x256xf32>
    %23 = arith.mulf %22, %16 : vector<4x256xf32>
    %c8 = arith.constant 8 : index
    %c0_22 = arith.constant 0 : index
    %24 = vector.load %arg12[%c8, %c0_22] : memref<36x256xf32, #tpu.memory_space<vmem>>, vector<4x256xf32>
    tpu.vector_store %arg12[%c8, %c0_22], %23 {strides = array<i32>} : memref<36x256xf32, #tpu.memory_space<vmem>>, vector<4x256xf32>,
    %c0_23 = arith.constant 0 : index
    %c127 = arith.constant 127 : index
    %25 = vector.load %arg10[%c0_23, %c127] : memref<4x512xf32, #tpu.memory_space<vmem>>, vector<4x256xf32>
    %26 = arith.mulf %25, %14 : vector<4x256xf32>
    %c12 = arith.constant 12 : index
    %c0_24 = arith.constant 0 : index
    %27 = vector.load %arg12[%c12, %c0_24] : memref<36x256xf32, #tpu.memory_space<vmem>>, vector<4x256xf32>
    tpu.vector_store %arg12[%c12, %c0_24], %26 {strides = array<i32>} : memref<36x256xf32, #tpu.memory_space<vmem>>, vector<4x256xf32>,
    %c0_25 = arith.constant 0 : index
    %c128_26 = arith.constant 128 : index
    %28 = vector.load %arg10[%c0_25, %c128_26] : memref<4x512xf32, #tpu.memory_space<vmem>>, vector<4x256xf32>
    %c16 = arith.constant 16 : index
    %c0_27 = arith.constant 0 : index
    %29 = vector.load %arg12[%c16, %c0_27] : memref<36x256xf32, #tpu.memory_space<vmem>>, vector<4x256xf32>
    tpu.vector_store %arg12[%c16, %c0_27], %28 {strides = array<i32>} : memref<36x256xf32, #tpu.memory_space<vmem>>, vector<4x256xf32>,
    %c0_28 = arith.constant 0 : index
    %c129 = arith.constant 129 : index
    %30 = vector.load %arg10[%c0_28, %c129] : memref<4x512xf32, #tpu.memory_space<vmem>>, vector<4x256xf32>
    %31 = arith.mulf %30, %16 : vector<4x256xf32>
    %c20 = arith.constant 20 : index
    %c0_29 = arith.constant 0 : index
    %32 = vector.load %arg12[%c20, %c0_29] : memref<36x256xf32, #tpu.memory_space<vmem>>, vector<4x256xf32>
    tpu.vector_store %arg12[%c20, %c0_29], %31 {strides = array<i32>} : memref<36x256xf32, #tpu.memory_space<vmem>>, vector<4x256xf32>,
    %c0_30 = arith.constant 0 : index
    %c143 = arith.constant 143 : index
    %33 = vector.load %arg10[%c0_30, %c143] : memref<4x512xf32, #tpu.memory_space<vmem>>, vector<4x256xf32>
    %34 = arith.mulf %33, %14 : vector<4x256xf32>
    %c24 = arith.constant 24 : index
    %c0_31 = arith.constant 0 : index
    %35 = vector.load %arg12[%c24, %c0_31] : memref<36x256xf32, #tpu.memory_space<vmem>>, vector<4x256xf32>
    tpu.vector_store %arg12[%c24, %c0_31], %34 {strides = array<i32>} : memref<36x256xf32, #tpu.memory_space<vmem>>, vector<4x256xf32>,
    %c0_32 = arith.constant 0 : index
    %c144 = arith.constant 144 : index
    %36 = vector.load %arg10[%c0_32, %c144] : memref<4x512xf32, #tpu.memory_space<vmem>>, vector<4x256xf32>
    %c28 = arith.constant 28 : index
    %c0_33 = arith.constant 0 : index
    %37 = vector.load %arg12[%c28, %c0_33] : memref<36x256xf32, #tpu.memory_space<vmem>>, vector<4x256xf32>
    tpu.vector_store %arg12[%c28, %c0_33], %36 {strides = array<i32>} : memref<36x256xf32, #tpu.memory_space<vmem>>, vector<4x256xf32>,
    %c0_34 = arith.constant 0 : index
    %c145 = arith.constant 145 : index
    %38 = vector.load %arg10[%c0_34, %c145] : memref<4x512xf32, #tpu.memory_space<vmem>>, vector<4x256xf32>
    %39 = arith.mulf %38, %16 : vector<4x256xf32>
    %c32 = arith.constant 32 : index
    %c0_35 = arith.constant 0 : index
    %40 = vector.load %arg12[%c32, %c0_35] : memref<36x256xf32, #tpu.memory_space<vmem>>, vector<4x256xf32>
    tpu.vector_store %arg12[%c32, %c0_35], %39 {strides = array<i32>} : memref<36x256xf32, #tpu.memory_space<vmem>>, vector<4x256xf32>,
    %c0_36 = arith.constant 0 : index
    %c0_37 = arith.constant 0 : index
    %41 = vector.load %arg2[%c0_36, %c0_37] : memref<8x36xf32, #tpu.memory_space<vmem>>, vector<8x36xf32>
    %c0_38 = arith.constant 0 : index
    %c0_39 = arith.constant 0 : index
    %42 = vector.load %arg12[%c0_38, %c0_39] : memref<36x256xf32, #tpu.memory_space<vmem>>, vector<36x256xf32>
    %cst_40 = arith.constant dense<0.000000e+00> : vector<8x256xf32>
    %43 = tpu.matmul %41, %42, %cst_40 {dimension_numbers = #tpu.dot_dimension_numbers<[1], [0], [0], [1], [0, 0, 1, 1], [], []>} : vector<8x36xf32>, vector<36x256xf32>, vector<8x256xf32> -> vector<8x256xf32>
    %c0_41 = arith.constant 0 : index
    %c0_42 = arith.constant 0 : index
    %44 = vector.load %arg3[%c0_41, %c0_42] : memref<8x1xf32, #tpu.memory_space<vmem>>, vector<8x1xf32>
    %45 = vector.broadcast %44 : vector<8x1xf32> to vector<8x256xf32>
    %46 = arith.mulf %43, %45 : vector<8x256xf32>
    %c0_43 = arith.constant 0 : index
    %c0_44 = arith.constant 0 : index
    %47 = vector.load %arg4[%c0_43, %c0_44] : memref<8x1xf32, #tpu.memory_space<vmem>>, vector<8x1xf32>
    %48 = vector.broadcast %47 : vector<8x1xf32> to vector<8x256xf32>
    %49 = arith.addf %46, %48 : vector<8x256xf32>
    %cst_45 = arith.constant 0.000000e+00 : f32
    %50 = vector.broadcast %cst_45 : f32 to vector<8x256xf32>
    %51 = arith.maximumf %49, %50 : vector<8x256xf32>
    %c0_46 = arith.constant 0 : index
    %c128_47 = arith.constant 128 : index
    %52 = vector.load %arg11[%c0_46, %c128_47] : memref<8x512xf32, #tpu.memory_space<vmem>>, vector<8x256xf32>
    tpu.vector_store %arg11[%c0_46, %c128_47], %51 {strides = array<i32>} : memref<8x512xf32, #tpu.memory_space<vmem>>, vector<8x256xf32>,
    %53 = vector.shape_cast %11 : vector<1x256xf32> to vector<1x256xf32>
    %54 = vector.broadcast %53 : vector<1x256xf32> to vector<8x256xf32>
    %55 = vector.shape_cast %12 : vector<1x256xf32> to vector<1x256xf32>
    %56 = vector.broadcast %55 : vector<1x256xf32> to vector<8x256xf32>
    %c0_48 = arith.constant 0 : index
    %c111_49 = arith.constant 111 : index
    %57 = vector.load %arg11[%c0_48, %c111_49] : memref<8x512xf32, #tpu.memory_space<vmem>>, vector<8x256xf32>
    %58 = arith.mulf %57, %54 : vector<8x256xf32>
    %c0_50 = arith.constant 0 : index
    %c0_51 = arith.constant 0 : index
    %59 = vector.load %arg13[%c0_50, %c0_51] : memref<72x256xf32, #tpu.memory_space<vmem>>, vector<8x256xf32>
    tpu.vector_store %arg13[%c0_50, %c0_51], %58 {strides = array<i32>} : memref<72x256xf32, #tpu.memory_space<vmem>>, vector<8x256xf32>,
    %c0_52 = arith.constant 0 : index
    %c112_53 = arith.constant 112 : index
    %60 = vector.load %arg11[%c0_52, %c112_53] : memref<8x512xf32, #tpu.memory_space<vmem>>, vector<8x256xf32>
    %c8_54 = arith.constant 8 : index
    %c0_55 = arith.constant 0 : index
    %61 = vector.load %arg13[%c8_54, %c0_55] : memref<72x256xf32, #tpu.memory_space<vmem>>, vector<8x256xf32>
    tpu.vector_store %arg13[%c8_54, %c0_55], %60 {strides = array<i32>} : memref<72x256xf32, #tpu.memory_space<vmem>>, vector<8x256xf32>,
    %c0_56 = arith.constant 0 : index
    %c113_57 = arith.constant 113 : index
    %62 = vector.load %arg11[%c0_56, %c113_57] : memref<8x512xf32, #tpu.memory_space<vmem>>, vector<8x256xf32>
    %63 = arith.mulf %62, %56 : vector<8x256xf32>
    %c16_58 = arith.constant 16 : index
    %c0_59 = arith.constant 0 : index
    %64 = vector.load %arg13[%c16_58, %c0_59] : memref<72x256xf32, #tpu.memory_space<vmem>>, vector<8x256xf32>
    tpu.vector_store %arg13[%c16_58, %c0_59], %63 {strides = array<i32>} : memref<72x256xf32, #tpu.memory_space<vmem>>, vector<8x256xf32>,
    %c0_60 = arith.constant 0 : index
    %c127_61 = arith.constant 127 : index
    %65 = vector.load %arg11[%c0_60, %c127_61] : memref<8x512xf32, #tpu.memory_space<vmem>>, vector<8x256xf32>
    %66 = arith.mulf %65, %54 : vector<8x256xf32>
    %c24_62 = arith.constant 24 : index
    %c0_63 = arith.constant 0 : index
    %67 = vector.load %arg13[%c24_62, %c0_63] : memref<72x256xf32, #tpu.memory_space<vmem>>, vector<8x256xf32>
    tpu.vector_store %arg13[%c24_62, %c0_63], %66 {strides = array<i32>} : memref<72x256xf32, #tpu.memory_space<vmem>>, vector<8x256xf32>,
    %c0_64 = arith.constant 0 : index
    %c128_65 = arith.constant 128 : index
    %68 = vector.load %arg11[%c0_64, %c128_65] : memref<8x512xf32, #tpu.memory_space<vmem>>, vector<8x256xf32>
    %c32_66 = arith.constant 32 : index
    %c0_67 = arith.constant 0 : index
    %69 = vector.load %arg13[%c32_66, %c0_67] : memref<72x256xf32, #tpu.memory_space<vmem>>, vector<8x256xf32>
    tpu.vector_store %arg13[%c32_66, %c0_67], %68 {strides = array<i32>} : memref<72x256xf32, #tpu.memory_space<vmem>>, vector<8x256xf32>,
    %c0_68 = arith.constant 0 : index
    %c129_69 = arith.constant 129 : index
    %70 = vector.load %arg11[%c0_68, %c129_69] : memref<8x512xf32, #tpu.memory_space<vmem>>, vector<8x256xf32>
    %71 = arith.mulf %70, %56 : vector<8x256xf32>
    %c40 = arith.constant 40 : index
    %c0_70 = arith.constant 0 : index
    %72 = vector.load %arg13[%c40, %c0_70] : memref<72x256xf32, #tpu.memory_space<vmem>>, vector<8x256xf32>
    tpu.vector_store %arg13[%c40, %c0_70], %71 {strides = array<i32>} : memref<72x256xf32, #tpu.memory_space<vmem>>, vector<8x256xf32>,
    %c0_71 = arith.constant 0 : index
    %c143_72 = arith.constant 143 : index
    %73 = vector.load %arg11[%c0_71, %c143_72] : memref<8x512xf32, #tpu.memory_space<vmem>>, vector<8x256xf32>
    %74 = arith.mulf %73, %54 : vector<8x256xf32>
    %c48 = arith.constant 48 : index
    %c0_73 = arith.constant 0 : index
    %75 = vector.load %arg13[%c48, %c0_73] : memref<72x256xf32, #tpu.memory_space<vmem>>, vector<8x256xf32>
    tpu.vector_store %arg13[%c48, %c0_73], %74 {strides = array<i32>} : memref<72x256xf32, #tpu.memory_space<vmem>>, vector<8x256xf32>,
    %c0_74 = arith.constant 0 : index
    %c144_75 = arith.constant 144 : index
    %76 = vector.load %arg11[%c0_74, %c144_75] : memref<8x512xf32, #tpu.memory_space<vmem>>, vector<8x256xf32>
    %c56 = arith.constant 56 : index
    %c0_76 = arith.constant 0 : index
    %77 = vector.load %arg13[%c56, %c0_76] : memref<72x256xf32, #tpu.memory_space<vmem>>, vector<8x256xf32>
    tpu.vector_store %arg13[%c56, %c0_76], %76 {strides = array<i32>} : memref<72x256xf32, #tpu.memory_space<vmem>>, vector<8x256xf32>,
    %c0_77 = arith.constant 0 : index
    %c145_78 = arith.constant 145 : index
    %78 = vector.load %arg11[%c0_77, %c145_78] : memref<8x512xf32, #tpu.memory_space<vmem>>, vector<8x256xf32>
    %79 = arith.mulf %78, %56 : vector<8x256xf32>
    %c64 = arith.constant 64 : index
    %c0_79 = arith.constant 0 : index
    %80 = vector.load %arg13[%c64, %c0_79] : memref<72x256xf32, #tpu.memory_space<vmem>>, vector<8x256xf32>
    tpu.vector_store %arg13[%c64, %c0_79], %79 {strides = array<i32>} : memref<72x256xf32, #tpu.memory_space<vmem>>, vector<8x256xf32>,
    %c0_80 = arith.constant 0 : index
    %c0_81 = arith.constant 0 : index
    %81 = vector.load %arg5[%c0_80, %c0_81] : memref<8x72xf32, #tpu.memory_space<vmem>>, vector<8x72xf32>
    %c0_82 = arith.constant 0 : index
    %c0_83 = arith.constant 0 : index
    %82 = vector.load %arg13[%c0_82, %c0_83] : memref<72x256xf32, #tpu.memory_space<vmem>>, vector<72x256xf32>
    %cst_84 = arith.constant dense<0.000000e+00> : vector<8x256xf32>
    %83 = tpu.matmul %81, %82, %cst_84 {dimension_numbers = #tpu.dot_dimension_numbers<[1], [0], [0], [1], [0, 0, 1, 1], [], []>} : vector<8x72xf32>, vector<72x256xf32>, vector<8x256xf32> -> vector<8x256xf32>
    %c0_85 = arith.constant 0 : index
    %c0_86 = arith.constant 0 : index
    %84 = vector.load %arg6[%c0_85, %c0_86] : memref<8x1xf32, #tpu.memory_space<vmem>>, vector<8x1xf32>
    %85 = vector.broadcast %84 : vector<8x1xf32> to vector<8x256xf32>
    %86 = arith.mulf %83, %85 : vector<8x256xf32>
    %c0_87 = arith.constant 0 : index
    %c0_88 = arith.constant 0 : index
    %87 = vector.load %arg7[%c0_87, %c0_88] : memref<8x1xf32, #tpu.memory_space<vmem>>, vector<8x1xf32>
    %88 = vector.broadcast %87 : vector<8x1xf32> to vector<8x256xf32>
    %89 = arith.addf %86, %88 : vector<8x256xf32>
    %cst_89 = arith.constant 0.000000e+00 : f32
    %90 = vector.broadcast %cst_89 : f32 to vector<8x256xf32>
    %91 = arith.maximumf %89, %90 : vector<8x256xf32>
    %c0_90 = arith.constant 0 : index
    %c0_91 = arith.constant 0 : index
    %c0_92 = arith.constant 0 : index
    %92 = vector.load %arg9[%c0_90, %c0_91, %c0_92] : memref<1x8x256xf32, #tpu.memory_space<vmem>>, vector<1x8x256xf32>
    %93 = vector.shape_cast %92 : vector<1x8x256xf32> to vector<8x256xf32>
    %94 = vector.shape_cast %91 : vector<8x256xf32> to vector<1x8x256xf32>
    tpu.vector_store %arg9[%c0_90, %c0_91, %c0_92], %94 {strides = array<i32>} : memref<1x8x256xf32, #tpu.memory_space<vmem>>, vector<1x8x256xf32>,
    return
  }
  func.func @transform_0(%arg0: i32) -> (i32, i32, i32) {
    %c0_i32 = arith.constant 0 : i32
    %c0_i32_0 = arith.constant 0 : i32
    %c0_i32_1 = arith.constant 0 : i32
    return %arg0, %c0_i32, %c0_i32_0 : i32, i32, i32
  }
  func.func @transform_1(%arg0: i32) -> (i32, i32) {
    %c0_i32 = arith.constant 0 : i32
    %c0_i32_0 = arith.constant 0 : i32
    %c0_i32_1 = arith.constant 0 : i32
    return %c0_i32, %c0_i32_0 : i32, i32
  }
  func.func @transform_2(%arg0: i32) -> (i32, i32) {
    %c0_i32 = arith.constant 0 : i32
    %c0_i32_0 = arith.constant 0 : i32
    %c0_i32_1 = arith.constant 0 : i32
    return %c0_i32, %c0_i32_0 : i32, i32
  }
  func.func @transform_3(%arg0: i32) -> (i32, i32) {
    %c0_i32 = arith.constant 0 : i32
    %c0_i32_0 = arith.constant 0 : i32
    %c0_i32_1 = arith.constant 0 : i32
    return %c0_i32, %c0_i32_0 : i32, i32
  }
  func.func @transform_4(%arg0: i32) -> (i32, i32) {
    %c0_i32 = arith.constant 0 : i32
    %c0_i32_0 = arith.constant 0 : i32
    %c0_i32_1 = arith.constant 0 : i32
    return %c0_i32, %c0_i32_0 : i32, i32
  }
  func.func @transform_5(%arg0: i32) -> (i32, i32) {
    %c0_i32 = arith.constant 0 : i32
    %c0_i32_0 = arith.constant 0 : i32
    %c0_i32_1 = arith.constant 0 : i32
    return %c0_i32, %c0_i32_0 : i32, i32
  }
  func.func @transform_6(%arg0: i32) -> (i32, i32) {
    %c0_i32 = arith.constant 0 : i32
    %c0_i32_0 = arith.constant 0 : i32
    %c0_i32_1 = arith.constant 0 : i32
    return %c0_i32, %c0_i32_0 : i32, i32
  }
  func.func @transform_7(%arg0: i32) -> (i32, i32) {
    %c0_i32 = arith.constant 0 : i32
    %c0_i32_0 = arith.constant 0 : i32
    %c0_i32_1 = arith.constant 0 : i32
    return %c0_i32, %c0_i32_0 : i32, i32
  }
  func.func @transform_8(%arg0: i32) -> (i32, i32, i32) {
    %c0_i32 = arith.constant 0 : i32
    %c0_i32_0 = arith.constant 0 : i32
    %c0_i32_1 = arith.constant 0 : i32
    return %arg0, %c0_i32, %c0_i32_0 : i32, i32, i32
  }
}

</mosaic_0001>

<llo_original>
// kernel: conv_block_pallas.1
$region0: #{conv_block_pallas.1}
  #allocation0 [shape = 'u32[]', space=smem, size = 0x4, offset = 0x4, fixed_abs, tag = 'smem constant byte address 0x4 - core index']
  #allocation1 [shape = 'u32[144,128]{1,0:T(1,128)}', space=vmem, size = 0x12000, scoped, tag = 'internal scratch']
  #allocation2 [shape = 'f32[4,512]{1,0:T(4,128)}', space=vmem, size = 0x2000, scoped, tag = 'scratch operand']
  #allocation3 [shape = 'f32[8,512]{1,0:T(8,128)}', space=vmem, size = 0x4000, scoped, tag = 'scratch operand']
  #allocation4 [shape = 'f32[36,256]{1,0:T(8,128)}', space=vmem, size = 0xa000, scoped, tag = 'scratch operand']
  #allocation5 [shape = 'f32[72,256]{1,0:T(8,128)}', space=vmem, size = 0x12000, scoped, tag = 'scratch operand']
  %s0 = inlined_call_operand.vmem [shape: f32[2,4,256], index: 0, kind: input, shape index: {}]
  %s1 = inlined_call_operand.vmem [shape: f32[8,36], index: 1, kind: input, shape index: {}]
  %s2 = inlined_call_operand.vmem [shape: f32[8,1], index: 2, kind: input, shape index: {}]
  %s3 = inlined_call_operand.vmem [shape: f32[8,1], index: 3, kind: input, shape index: {}]
  %s4 = inlined_call_operand.vmem [shape: f32[8,72], index: 4, kind: input, shape index: {}]
  %s5 = inlined_call_operand.vmem [shape: f32[8,1], index: 5, kind: input, shape index: {}]
  %s6 = inlined_call_operand.vmem [shape: f32[8,1], index: 6, kind: input, shape index: {}]
  %s7 = inlined_call_operand.vmem [shape: f32[2,256], index: 7, kind: input, shape index: {}]
  %s8 = inlined_call_operand.vmem [shape: f32[2,8,256], index: 8, kind: output, shape index: {}]
  %s9 = sld [smem:[#allocation0]]
  $region65: #{conv_block_pallas.1} parent=0
    _
  %s11 = ssub.s32 1, %s9
  %s12 = scalar_select 0, %s11, %s9
  loop: start=0, step=1, limit=4
  $region2: #{conv_block_pallas.1} parent=0 // loop_pre_header
    _
  $region3: #{conv_block_pallas.1} parent=0 // loop_header
    %s14 = sphi 0, %s18
    %p15 = scmp.ge.s32.totalorder %s14, 4
    %s24 = sphi 0, %s26
    %s27 = sphi 0, %s24
    %s28 = sphi 0, %s27
    %s44 = sphi 0, %s28
    %s48 = sphi 0, %s48
    %s50 = sphi 0, %s48
    %s51 = sphi 0, %s50
    %s65 = sphi 0, %s51
    %s69 = sphi 0, %s69
    %s71 = sphi 0, %s69
    %s72 = sphi 0, %s71
    %s86 = sphi 0, %s72
    %s90 = sphi 0, %s90
    %s92 = sphi 0, %s90
    %s93 = sphi 0, %s92
    %s107 = sphi 0, %s93
    %s111 = sphi 0, %s111
    %s113 = sphi 0, %s111
    %s114 = sphi 0, %s113
    %s128 = sphi 0, %s114
    %s132 = sphi 0, %s132
    %s134 = sphi 0, %s132
    %s135 = sphi 0, %s134
    %s149 = sphi 0, %s135
    %s153 = sphi 0, %s153
    %s155 = sphi 0, %s153
    %s156 = sphi 0, %s155
    %s170 = sphi 0, %s156
    %s174 = sphi 0, %s174
    %s176 = sphi 0, %s174
    %s177 = sphi 0, %s176
    %s191 = sphi 0, %s177
    %s197 = sphi 0, %s199
    %s200 = sphi 0, %s197
    %s201 = sphi 0, %s200
    %s217 = sphi 0, %s201
  $region4: #{conv_block_pallas.1} parent=0 // loop_header_branch
    %17 = sbr.rel (%p15) target = $region8
  $region5: #{conv_block_pallas.1} parent=0 // loop_body
    %s19 = ssub.s32 %s14, 1
    %s20 = ssub.s32 %s14, 2
    %s21 = sadd.s32 %s14, 1
    %s22 = ssub.s32 %s14, %s21
    %p23 = scmp.eq.s32.totalorder %s22, 0
    %s25 = sadd.s32 %s24, 1
    %s26 = scalar_select %p23, %s24, %s25
    %p29 = pneg %p23
    %p30 = scmp.eq.s32.totalorder %s14, 1
    %p31 = por %p29, %p30
    %p32 = scmp.ne.s32.totalorder %s24, %s27
    %p33 = scmp.eq.s32.totalorder %s14, 0
    %p34 = por %p32, %p33
    %p35 = scmp.ne.s32.totalorder %s24, %s27
    %p36 = scmp.eq.s32.totalorder %s19, 1
    %p37 = por %p35, %p36
    %p38 = scmp.ne.s32.totalorder %s27, %s28
    %p39 = scmp.eq.s32.totalorder %s19, 0
    %p40 = por %p38, %p39
    %p41 = scmp.ne.s32.totalorder %s27, %s28
    %p42 = scmp.eq.s32.totalorder %s20, 1
    %p43 = por %p41, %p42
    %p45 = scmp.ne.s32.totalorder %s28, %s44
    %p46 = scmp.eq.s32.totalorder %s20, 0
    %p47 = por %p45, %p46
    %s49 = sadd.s32 %s48, 1
    %p52 = scmp.eq.s32.totalorder %s14, 1
    %p53 = scmp.ne.s32.totalorder %s48, %s50
    %p54 = scmp.eq.s32.totalorder %s14, 0
    %p55 = por %p53, %p54
    %p56 = scmp.ne.s32.totalorder %s48, %s50
    %p57 = scmp.eq.s32.totalorder %s19, 1
    %p58 = por %p56, %p57
    %p59 = scmp.ne.s32.totalorder %s50, %s51
    %p60 = scmp.eq.s32.totalorder %s19, 0
    %p61 = por %p59, %p60
    %p62 = scmp.ne.s32.totalorder %s50, %s51
    %p63 = scmp.eq.s32.totalorder %s20, 1
    %p64 = por %p62, %p63
    %p66 = scmp.ne.s32.totalorder %s51, %s65
    %p67 = scmp.eq.s32.totalorder %s20, 0
    %p68 = por %p66, %p67
    %s70 = sadd.s32 %s69, 1
    %p73 = scmp.eq.s32.totalorder %s14, 1
    %p74 = scmp.ne.s32.totalorder %s69, %s71
    %p75 = scmp.eq.s32.totalorder %s14, 0
    %p76 = por %p74, %p75
    %p77 = scmp.ne.s32.totalorder %s69, %s71
    %p78 = scmp.eq.s32.totalorder %s19, 1
    %p79 = por %p77, %p78
    %p80 = scmp.ne.s32.totalorder %s71, %s72
    %p81 = scmp.eq.s32.totalorder %s19, 0
    %p82 = por %p80, %p81
    %p83 = scmp.ne.s32.totalorder %s71, %s72
    %p84 = scmp.eq.s32.totalorder %s20, 1
    %p85 = por %p83, %p84
    %p87 = scmp.ne.s32.totalorder %s72, %s86
    %p88 = scmp.eq.s32.totalorder %s20, 0
    %p89 = por %p87, %p88
    %s91 = sadd.s32 %s90, 1
    %p94 = scmp.eq.s32.totalorder %s14, 1
    %p95 = scmp.ne.s32.totalorder %s90, %s92
    %p96 = scmp.eq.s32.totalorder %s14, 0
    %p97 = por %p95, %p96
    %p98 = scmp.ne.s32.totalorder %s90, %s92
    %p99 = scmp.eq.s32.totalorder %s19, 1
    %p100 = por %p98, %p99
    %p101 = scmp.ne.s32.totalorder %s92, %s93
    %p102 = scmp.eq.s32.totalorder %s19, 0
    %p103 = por %p101, %p102
    %p104 = scmp.ne.s32.totalorder %s92, %s93
    %p105 = scmp.eq.s32.totalorder %s20, 1
    %p106 = por %p104, %p105
    %p108 = scmp.ne.s32.totalorder %s93, %s107
    %p109 = scmp.eq.s32.totalorder %s20, 0
    %p110 = por %p108, %p109
    %s112 = sadd.s32 %s111, 1
    %p115 = scmp.eq.s32.totalorder %s14, 1
    %p116 = scmp.ne.s32.totalorder %s111, %s113
    %p117 = scmp.eq.s32.totalorder %s14, 0
    %p118 = por %p116, %p117
    %p119 = scmp.ne.s32.totalorder %s111, %s113
    %p120 = scmp.eq.s32.totalorder %s19, 1
    %p121 = por %p119, %p120
    %p122 = scmp.ne.s32.totalorder %s113, %s114
    %p123 = scmp.eq.s32.totalorder %s19, 0
    %p124 = por %p122, %p123
    %p125 = scmp.ne.s32.totalorder %s113, %s114
    %p126 = scmp.eq.s32.totalorder %s20, 1
    %p127 = por %p125, %p126
    %p129 = scmp.ne.s32.totalorder %s114, %s128
    %p130 = scmp.eq.s32.totalorder %s20, 0
    %p131 = por %p129, %p130
    %s133 = sadd.s32 %s132, 1
    %p136 = scmp.eq.s32.totalorder %s14, 1
    %p137 = scmp.ne.s32.totalorder %s132, %s134
    %p138 = scmp.eq.s32.totalorder %s14, 0
    %p139 = por %p137, %p138
    %p140 = scmp.ne.s32.totalorder %s132, %s134
    %p141 = scmp.eq.s32.totalorder %s19, 1
    %p142 = por %p140, %p141
    %p143 = scmp.ne.s32.totalorder %s134, %s135
    %p144 = scmp.eq.s32.totalorder %s19, 0
    %p145 = por %p143, %p144
    %p146 = scmp.ne.s32.totalorder %s134, %s135
    %p147 = scmp.eq.s32.totalorder %s20, 1
    %p148 = por %p146, %p147
    %p150 = scmp.ne.s32.totalorder %s135, %s149
    %p151 = scmp.eq.s32.totalorder %s20, 0
    %p152 = por %p150, %p151
    %s154 = sadd.s32 %s153, 1
    %p157 = scmp.eq.s32.totalorder %s14, 1
    %p158 = scmp.ne.s32.totalorder %s153, %s155
    %p159 = scmp.eq.s32.totalorder %s14, 0
    %p160 = por %p158, %p159
    %p161 = scmp.ne.s32.totalorder %s153, %s155
    %p162 = scmp.eq.s32.totalorder %s19, 1
    %p163 = por %p161, %p162
    %p164 = scmp.ne.s32.totalorder %s155, %s156
    %p165 = scmp.eq.s32.totalorder %s19, 0
    %p166 = por %p164, %p165
    %p167 = scmp.ne.s32.totalorder %s155, %s156
    %p168 = scmp.eq.s32.totalorder %s20, 1
    %p169 = por %p167, %p168
    %p171 = scmp.ne.s32.totalorder %s156, %s170
    %p172 = scmp.eq.s32.totalorder %s20, 0
    %p173 = por %p171, %p172
    %s175 = sadd.s32 %s174, 1
    %p178 = scmp.eq.s32.totalorder %s14, 1
    %p179 = scmp.ne.s32.totalorder %s174, %s176
    %p180 = scmp.eq.s32.totalorder %s14, 0
    %p181 = por %p179, %p180
    %p182 = scmp.ne.s32.totalorder %s174, %s176
    %p183 = scmp.eq.s32.totalorder %s19, 1
    %p184 = por %p182, %p183
    %p185 = scmp.ne.s32.totalorder %s176, %s177
    %p186 = scmp.eq.s32.totalorder %s19, 0
    %p187 = por %p185, %p186
    %p188 = scmp.ne.s32.totalorder %s176, %s177
    %p189 = scmp.eq.s32.totalorder %s20, 1
    %p190 = por %p188, %p189
    %p192 = scmp.ne.s32.totalorder %s177, %s191
    %p193 = scmp.eq.s32.totalorder %s20, 0
    %p194 = por %p192, %p193
    %s195 = ssub.s32 %s14, %s21
    %p196 = scmp.eq.s32.totalorder %s195, 0
    %s198 = sadd.s32 %s197, 1
    %s199 = scalar_select %p196, %s197, %s198
    %p202 = pneg %p196
    %p203 = scmp.eq.s32.totalorder %s14, 1
    %p204 = por %p202, %p203
    %p205 = scmp.ne.s32.totalorder %s197, %s200
    %p206 = scmp.eq.s32.totalorder %s14, 0
    %p207 = por %p205, %p206
    %p208 = scmp.ne.s32.totalorder %s197, %s200
    %p209 = scmp.eq.s32.totalorder %s19, 1
    %p210 = por %p208, %p209
    %p211 = scmp.ne.s32.totalorder %s200, %s201
    %p212 = scmp.eq.s32.totalorder %s19, 0
    %p213 = por %p211, %p212
    %p214 = scmp.ne.s32.totalorder %s200, %s201
    %p215 = scmp.eq.s32.totalorder %s20, 1
    %p216 = por %p214, %p215
    %p218 = scmp.ne.s32.totalorder %s201, %s217
    %p219 = scmp.eq.s32.totalorder %s20, 0
    %p220 = por %p218, %p219
    %p221 = scmp.le.s32.totalorder 1, %s14
    %p222 = scmp.lt.s32.totalorder %s14, 3
    %p223 = pnand %p221, %p222
    %p224 = pneg %p223
    // Predicated region
    $region9: #{conv_block_pallas.1} parent=5 // pred_check
      _
    $region10: #{conv_block_pallas.1} parent=5 // pred_check_branch
      %226 = sbr.rel (%p223) target = $region12
    $region11: #{conv_block_pallas.1} parent=5 // pred_region
      %s227 = ssub.s32 %s14, 1
      // Predicated region
      $region13: #{conv_block_pallas.1} parent=11 // pred_check
        %p228 = pneg %p61
      $region14: #{conv_block_pallas.1} parent=11 // pred_check_branch
        %230 = sbr.rel (%p228) target = $region16
      $region15: #{conv_block_pallas.1} parent=11 // pred_region
        _
      $region16: #{conv_block_pallas.1} parent=11 // pred_fallthru
        _
      // Predicated region
      $region17: #{conv_block_pallas.1} parent=11 // pred_check
        %p231 = pneg %p82
      $region18: #{conv_block_pallas.1} parent=11 // pred_check_branch
        %233 = sbr.rel (%p231) target = $region20
      $region19: #{conv_block_pallas.1} parent=11 // pred_region
        _
      $region20: #{conv_block_pallas.1} parent=11 // pred_fallthru
        _
      // Predicated region
      $region21: #{conv_block_pallas.1} parent=11 // pred_check
        %p234 = pneg %p103
      $region22: #{conv_block_pallas.1} parent=11 // pred_check_branch
        %236 = sbr.rel (%p234) target = $region24
      $region23: #{conv_block_pallas.1} parent=11 // pred_region
        _
      $region24: #{conv_block_pallas.1} parent=11 // pred_fallthru
        _
      // Predicated region
      $region25: #{conv_block_pallas.1} parent=11 // pred_check
        %p237 = pneg %p124
      $region26: #{conv_block_pallas.1} parent=11 // pred_check_branch
        %239 = sbr.rel (%p237) target = $region28
      $region27: #{conv_block_pallas.1} parent=11 // pred_region
        _
      $region28: #{conv_block_pallas.1} parent=11 // pred_fallthru
        _
      // Predicated region
      $region29: #{conv_block_pallas.1} parent=11 // pred_check
        %p240 = pneg %p145
      $region30: #{conv_block_pallas.1} parent=11 // pred_check_branch
        %242 = sbr.rel (%p240) target = $region32
      $region31: #{conv_block_pallas.1} parent=11 // pred_region
        _
      $region32: #{conv_block_pallas.1} parent=11 // pred_fallthru
        _
      // Predicated region
      $region33: #{conv_block_pallas.1} parent=11 // pred_check
        %p243 = pneg %p166
      $region34: #{conv_block_pallas.1} parent=11 // pred_check_branch
        %245 = sbr.rel (%p243) target = $region36
      $region35: #{conv_block_pallas.1} parent=11 // pred_region
        _
      $region36: #{conv_block_pallas.1} parent=11 // pred_fallthru
        _
      // Predicated region
      $region37: #{conv_block_pallas.1} parent=11 // pred_check
        %p246 = pneg %p187
      $region38: #{conv_block_pallas.1} parent=11 // pred_check_branch
        %248 = sbr.rel (%p246) target = $region40
      $region39: #{conv_block_pallas.1} parent=11 // pred_region
        _
      $region40: #{conv_block_pallas.1} parent=11 // pred_fallthru
        _
    $region12: #{conv_block_pallas.1} parent=5 // pred_fallthru
      _
    %p249 = scmp.lt.s32.totalorder %s14, 2
    // Predicated region
    $region41: #{conv_block_pallas.1} parent=5 // pred_check
      %p250 = pneg %p249
    $region42: #{conv_block_pallas.1} parent=5 // pred_check_branch
      %252 = sbr.rel (%p250) target = $region44
    $region43: #{conv_block_pallas.1} parent=5 // pred_region
      // Predicated region
      $region45: #{conv_block_pallas.1} parent=43 // pred_check
        %p253 = pneg %p34
      $region46: #{conv_block_pallas.1} parent=43 // pred_check_branch
        %255 = sbr.rel (%p253) target = $region48
      $region47: #{conv_block_pallas.1} parent=43 // pred_region
        %p256 = scmp.lt.s32.totalorder %s14, 1
        %s257 = scalar_select %p256, %s14, 1
        %s258 = smul.addr %s257, 2
        %s259 = smul.addr %s258, 4
        %s260 = scalar_lea.vmem %s0, %s259
      $region48: #{conv_block_pallas.1} parent=43 // pred_fallthru
        _
    $region44: #{conv_block_pallas.1} parent=5 // pred_fallthru
      _
    %p261 = scmp.le.s32.totalorder 1, %s14
    %p262 = scmp.lt.s32.totalorder %s14, 3
    %p263 = pnand %p261, %p262
    %p264 = pneg %p263
    // Predicated region
    $region49: #{conv_block_pallas.1} parent=5 // pred_check
      _
    $region50: #{conv_block_pallas.1} parent=5 // pred_check_branch
      %266 = sbr.rel (%p263) target = $region52
    $region51: #{conv_block_pallas.1} parent=5 // pred_region
      %s267 = ssub.s32 %s14, 1
      %p268 = scmp.lt.s32.totalorder %s19, 1
      %s269 = scalar_select %p268, %s19, 1
      %s270 = smul.addr %s269, 2
      %s271 = smul.addr %s270, 4
      %s272 = scalar_lea.vmem %s0, %s271
      %p273 = pneg %p40
      %p274 = pneg %p37
      %p275 = pneg %p61
      %p276 = pneg %p58
      %p277 = pneg %p82
      %p278 = pneg %p79
      %p279 = pneg %p103
      %p280 = pneg %p100
      %p281 = pneg %p124
      %p282 = pneg %p121
      %p283 = pneg %p145
      %p284 = pneg %p142
      %p285 = pneg %p166
      %p286 = pneg %p163
      %p287 = pneg %p187
      %p288 = pneg %p184
      %p289 = pneg %p213
      %p290 = pneg %p210
      %p291 = scmp.lt.s32.totalorder %s19, 1
      %s292 = scalar_select %p291, %s19, 1
      %s293 = smul.addr %s292, 2
      %s294 = smul.addr %s293, 8
      %s295 = scalar_lea.vmem %s8, %s294
      %p296 = scmp.lt.s32.totalorder %s19, 1
      %s297 = scalar_select %p296, %s19, 1
      %s298 = smul.addr %s297, 2
      %s299 = smul.addr %s298, 4
      %s300 = scalar_lea.vmem %s0, %s299
      %p301 = scmp.lt.s32.totalorder %s19, 1
      %s302 = scalar_select %p301, %s19, 1
      %s303 = smul.addr %s302, 2
      %s304 = smul.addr %s303, 8
      %s305 = scalar_lea.vmem %s8, %s304
      %306 = vst [vmem:[#allocation2] sm:$0xf] 0.0
      %307 = vst [vmem:[#allocation2 + $0xc] sm:$0xf] 0.0
      %308 = vst [vmem:[#allocation3] sm:$0xff] 0.0
      %309 = vst [vmem:[#allocation3 + $0x18] sm:$0xff] 0.0
      %v310 = vld [vmem:[%s300] sm:$0xff]
      %311 = vst [vmem:[#allocation2 + $0x4] sm:$0xff] %v310
      %v312 = vld [vmem:[%s7] ss:$2 sm:$0x3]
      %s313 = scalar_lea.vmem %s7, 1
      %v314 = vld [vmem:[%s313] ss:$2 sm:$0x3]
      %v316 = vlaneseq
      %v317 = vshrl.u32 %v316, 7
      %v318 = vsub.s32 0, %v317
      %v319 = vrot.slane %v312, %v318
      %v320 = vlaneseq
      %v321 = vshrl.u32 %v320, 7
      %v322 = vsub.s32 1, %v321
      %v323 = vrot.slane %v312, %v322
      %v325 = vlaneseq
      %v326 = vshrl.u32 %v325, 7
      %v327 = vsub.s32 0, %v326
      %v328 = vrot.slane %v314, %v327
      %v329 = vlaneseq
      %v330 = vshrl.u32 %v329, 7
      %v331 = vsub.s32 1, %v330
      %v332 = vrot.slane %v314, %v331
      %v333 = vld [vmem:[#allocation2] sm:$0xff]
      %v334 = vld [vmem:[#allocation2 + $0x8] sm:$0xf]
      %v335 = vcombine.low %v319, %v323
      %336 = vrot.lane.b32.xlu0 %v335, 111
      %v337 = vpop.permute.xlu0 %336
      %v338 = vrot.slane %v337, 4
      %vm339 = vcmask 908288
      %v340 = vsel %vm339, %v338, %v337
      %v343 = vmul.f32 %v333, %v340
      %v344 = vmul.f32 %v334, %v338
      %v347 = vcombine.high %v343, %v343
      %348 = vrot.lane.b32.xlu0 %v343, 17
      %v349 = vpop.permute.xlu0 %348
      %350 = vrot.lane.b32.xlu0 %v347, 17
      %v351 = vpop.permute.xlu0 %350
      %352 = vrot.lane.b32.xlu0 %v344, 17
      %v353 = vpop.permute.xlu0 %352
      %vm354 = vcmask 138240
      %v355 = vsel %vm354, %v349, %v351
      %v356 = vsel %vm354, %v351, %v353
      %359 = vst [vmem:[#allocation4] sm:$0xf] %v355
      %360 = vst [vmem:[#allocation4 + $0x8] sm:$0xf] %v356
      %v361 = vld [vmem:[#allocation2] sm:$0xff]
      %v362 = vld [vmem:[#allocation2 + $0x8] sm:$0xf]
      %v365 = vcombine.low %v361, %v361
      %v366 = vcombine.low %v362, %v362
      %367 = vrot.lane.b32.xlu0 %v365, 16
      %v368 = vpop.permute.xlu0 %367
      %369 = vrot.lane.b32.xlu0 %v361, 16
      %v370 = vpop.permute.xlu0 %369
      %371 = vrot.lane.b32.xlu0 %v366, 16
      %v372 = vpop.permute.xlu0 %371
      %vm373 = vcmask 130048
      %v374 = vsel %vm373, %v368, %v370
      %v375 = vsel %vm373, %v370, %v372
      %378 = vst [vmem:[#allocation4] sm:$0xf0] %v374
      %379 = vst [vmem:[#allocation4 + $0x8] sm:$0xf0] %v375
      %v380 = vld [vmem:[#allocation2] sm:$0xff]
      %v381 = vld [vmem:[#allocation2 + $0x8] sm:$0xf]
      %v382 = vcombine.low %v328, %v332
      %383 = vrot.lane.b32.xlu0 %v382, 113
      %v384 = vpop.permute.xlu0 %383
      %v385 = vrot.slane %v384, 4
      %vm386 = vcmask 924672
      %v387 = vsel %vm386, %v385, %v384
      %v390 = vmul.f32 %v380, %v387
      %v391 = vmul.f32 %v381, %v385
      %v394 = vcombine.high %v390, %v390
      %395 = vrot.lane.b32.xlu0 %v390, 15
      %v396 = vpop.permute.xlu0 %395
      %397 = vrot.lane.b32.xlu0 %v394, 15
      %v398 = vpop.permute.xlu0 %397
      %399 = vrot.lane.b32.xlu0 %v391, 15
      %v400 = vpop.permute.xlu0 %399
      %vm401 = vcmask 121856
      %v402 = vsel %vm401, %v396, %v398
      %v403 = vsel %vm401, %v398, %v400
      %406 = vst [vmem:[#allocation4 + $0x10] sm:$0xf] %v402
      %407 = vst [vmem:[#allocation4 + $0x18] sm:$0xf] %v403
      %v408 = vld [vmem:[#allocation2] sm:$0xff]
      %v409 = vld [vmem:[#allocation2 + $0x8] sm:$0xf]
      %410 = vrot.lane.b32.xlu0 %v335, 127
      %v411 = vpop.permute.xlu0 %410
      %v412 = vrot.slane %v411, 4
      %vm413 = vcmask 1039360
      %v414 = vsel %vm413, %v412, %v411
      %v417 = vmul.f32 %v408, %v414
      %v418 = vmul.f32 %v409, %v412
      %v421 = vcombine.low %v417, %v417
      %v422 = vcombine.low %v418, %v418
      %423 = vrot.lane.b32.xlu0 %v421, 1
      %v424 = vpop.permute.xlu0 %423
      %425 = vrot.lane.b32.xlu0 %v417, 1
      %v426 = vpop.permute.xlu0 %425
      %427 = vrot.lane.b32.xlu0 %v422, 1
      %v428 = vpop.permute.xlu0 %427
      %vm429 = vcmask 7168
      %v430 = vsel %vm429, %v424, %v426
      %v431 = vsel %vm429, %v426, %v428
      %434 = vst [vmem:[#allocation4 + $0x10] sm:$0xf0] %v430
      %435 = vst [vmem:[#allocation4 + $0x18] sm:$0xf0] %v431
      %v436 = vld [vmem:[#allocation2 + $0x4] sm:$0xff]
      %v438 = vcombine.high %v436, %v436
      %440 = vst [vmem:[#allocation4 + $0x20] sm:$0xf] %v436
      %441 = vst [vmem:[#allocation4 + $0x28] sm:$0xf] %v438
      %v442 = vld [vmem:[#allocation2 + $0x4] sm:$0xff]
      %v443 = vld [vmem:[#allocation2 + $0xc] sm:$0xf]
      %444 = vrot.lane.b32.xlu0 %v382, 1
      %v445 = vpop.permute.xlu0 %444
      %v446 = vrot.slane %v445, 4
      %v447 = vsel %vm429, %v446, %v445
      %v450 = vmul.f32 %v442, %v447
      %v451 = vmul.f32 %v443, %v446
      %v454 = vcombine.low %v450, %v450
      %v455 = vcombine.low %v451, %v451
      %456 = vrot.lane.b32.xlu0 %v454, 127
      %v457 = vpop.permute.xlu0 %456
      %458 = vrot.lane.b32.xlu0 %v450, 127
      %v459 = vpop.permute.xlu0 %458
      %460 = vrot.lane.b32.xlu0 %v455, 127
      %v461 = vpop.permute.xlu0 %460
      %v462 = vsel %vm413, %v457, %v459
      %v463 = vsel %vm413, %v459, %v461
      %466 = vst [vmem:[#allocation4 + $0x20] sm:$0xf0] %v462
      %467 = vst [vmem:[#allocation4 + $0x28] sm:$0xf0] %v463
      %v468 = vld [vmem:[#allocation2 + $0x4] sm:$0xff]
      %v469 = vld [vmem:[#allocation2 + $0xc] sm:$0xf]
      %470 = vrot.lane.b32.xlu0 %v335, 15
      %v471 = vpop.permute.xlu0 %470
      %v472 = vrot.slane %v471, 4
      %v473 = vsel %vm401, %v472, %v471
      %v476 = vmul.f32 %v468, %v473
      %v477 = vmul.f32 %v469, %v472
      %v480 = vcombine.high %v476, %v476
      %481 = vrot.lane.b32.xlu0 %v476, 113
      %v482 = vpop.permute.xlu0 %481
      %483 = vrot.lane.b32.xlu0 %v480, 113
      %v484 = vpop.permute.xlu0 %483
      %485 = vrot.lane.b32.xlu0 %v477, 113
      %v486 = vpop.permute.xlu0 %485
      %v487 = vsel %vm386, %v482, %v484
      %v488 = vsel %vm386, %v484, %v486
      %491 = vst [vmem:[#allocation4 + $0x30] sm:$0xf] %v487
      %492 = vst [vmem:[#allocation4 + $0x38] sm:$0xf] %v488
      %v493 = vld [vmem:[#allocation2 + $0x4] sm:$0xff]
      %v494 = vld [vmem:[#allocation2 + $0xc] sm:$0xf]
      %v497 = vcombine.low %v493, %v493
      %v498 = vcombine.low %v494, %v494
      %499 = vrot.lane.b32.xlu0 %v497, 112
      %v500 = vpop.permute.xlu0 %499
      %501 = vrot.lane.b32.xlu0 %v493, 112
      %v502 = vpop.permute.xlu0 %501
      %503 = vrot.lane.b32.xlu0 %v498, 112
      %v504 = vpop.permute.xlu0 %503
      %vm505 = vcmask 916480
      %v506 = vsel %vm505, %v500, %v502
      %v507 = vsel %vm505, %v502, %v504
      %510 = vst [vmem:[#allocation4 + $0x30] sm:$0xf0] %v506
      %511 = vst [vmem:[#allocation4 + $0x38] sm:$0xf0] %v507
      %v512 = vld [vmem:[#allocation2 + $0x4] sm:$0xff]
      %v513 = vld [vmem:[#allocation2 + $0xc] sm:$0xf]
      %514 = vrot.lane.b32.xlu0 %v382, 17
      %v515 = vpop.permute.xlu0 %514
      %v516 = vrot.slane %v515, 4
      %v517 = vsel %vm354, %v516, %v515
      %v520 = vmul.f32 %v512, %v517
      %v521 = vmul.f32 %v513, %v516
      %v524 = vcombine.high %v520, %v520
      %525 = vrot.lane.b32.xlu0 %v520, 111
      %v526 = vpop.permute.xlu0 %525
      %527 = vrot.lane.b32.xlu0 %v524, 111
      %v528 = vpop.permute.xlu0 %527
      %529 = vrot.lane.b32.xlu0 %v521, 111
      %v530 = vpop.permute.xlu0 %529
      %v531 = vsel %vm339, %v526, %v528
      %v532 = vsel %vm339, %v528, %v530
      %535 = vst [vmem:[#allocation4 + $0x40] sm:$0xf] %v531
      %536 = vst [vmem:[#allocation4 + $0x48] sm:$0xf] %v532
      %v537 = vld [vmem:[%s1] sm:$0xff]
      %v538 = vld [vmem:[#allocation4] sm:$0xff]
      %v539 = vld [vmem:[#allocation4 + $0x8] sm:$0xff]
      %v540 = vld [vmem:[#allocation4 + $0x10] sm:$0xff]
      %v541 = vld [vmem:[#allocation4 + $0x18] sm:$0xff]
      %v542 = vld [vmem:[#allocation4 + $0x20] sm:$0xff]
      %v543 = vld [vmem:[#allocation4 + $0x28] sm:$0xff]
      %v544 = vld [vmem:[#allocation4 + $0x30] sm:$0xff]
      %v545 = vld [vmem:[#allocation4 + $0x38] sm:$0xff]
      %v546 = vld [vmem:[#allocation4 + $0x40] sm:$0xf]
      %v547 = vld [vmem:[#allocation4 + $0x48] sm:$0xf]
      %vm548 = vcmask 293888
      %v550 = vsel %vm548, %v537, 0
      %vm552 = vcmask 1043456
      %v554 = vsel %vm552, %v546, 0
      %v557 = vsel %vm552, %v547, 0
      %559 = vmatprep.subr.mxu0 %v539
      %560 = vmatpush1.msra.mxu0 %v538
      %561 = vmatprep.subr.mxu0 %v541
      %562 = vmatpush1.msra.mxu0 %v540
      %563 = vmatprep.subr.mxu0 %v543
      %564 = vmatpush1.msra.mxu0 %v542
      %565 = vmatprep.subr.mxu0 %v545
      %566 = vmatpush1.msra.mxu0 %v544
      %567 = vmatprep.subr.mxu0 %v557
      %568 = vmatpush1.msra.mxu0 %v554
      %569 = vmatprep.subr.mxu0 0.0
      %570 = vmatpush1.msra.mxu0 0.0
      %571 = vmatprep.subr.mxu0 0.0
      %572 = vmatpush1.msra.mxu0 0.0
      %573 = vmatprep.subr.mxu0 0.0
      %574 = vmatpush1.msra.mxu0 0.0
      %575 = vmatprep.subr.mxu0 0.0
      %576 = vmatpush1.msra.mxu0 0.0
      %577 = vmatprep.subr.mxu0 0.0
      %578 = vmatpush1.msra.mxu0 0.0
      %579 = vmatprep.subr.mxu0 0.0
      %580 = vmatpush1.msra.mxu0 0.0
      %581 = vmatprep.subr.mxu0 0.0
      %582 = vmatpush1.msra.mxu0 0.0
      %583 = vmatprep.subr.mxu0 0.0
      %584 = vmatpush1.msra.mxu0 0.0
      %585 = vmatprep.subr.mxu0 0.0
      %586 = vmatpush1.msra.mxu0 0.0
      %587 = vmatprep.subr.mxu0 0.0
      %588 = vmatpush1.msra.mxu0 0.0
      %589 = vmatprep.subr.mxu0 0.0
      %590 = vmatpush1.msra.mxu0 0.0
      %591 = vmatprep.subr.mxu0 0.0
      %592 = vmatpush1.msra.mxu0 0.0
      %593 = vmatprep.subr.mxu0 0.0
      %594 = vmatpush1.msra.mxu0 0.0
      %595 = vmatprep.subr.mxu0 0.0
      %596 = vmatpush1.msra.mxu0 0.0
      %597 = vmatprep.subr.mxu0 0.0
      %598 = vmatpush1.msra.mxu0 0.0
      %599 = vmatprep.subr.mxu0 0.0
      %600 = vmatpush1.msra.mxu0 0.0
      %601 = vmatprep.subr.mxu0 0.0
      %602 = vmatpush1.msra.mxu0 0.0
      %603 = vmatprep.subr.mxu0 0.0
      %604 = vmatpush1.msra.mxu0 0.0
      %605 = vmatprep.subr.mxu0 0.0
      %606 = vmatpush1.msra.mxu0 0.0
      %607 = vmatprep.subr.mxu0 0.0
      %608 = vmatpush1.msra.mxu0 0.0
      %609 = vmatprep.subr.mxu0 0.0
      %610 = vmatpush1.msra.mxu0 0.0
      %611 = vmatprep.subr.mxu0 0.0
      %612 = vmatpush1.msra.mxu0 0.0
      %613 = vmatprep.subr.mxu0 0.0
      %614 = vmatpush1.msra.mxu0 0.0
      %615 = vmatprep.subr.mxu0 0.0
      %616 = vmatpush1.msra.mxu0 0.0
      %617 = vmatprep.subr.mxu0 0.0
      %618 = vmatpush1.msra.mxu0 0.0
      %619 = vmatprep.subr.mxu0 0.0
      %620 = vmatpush1.msra.mxu0 0.0
      %621 = vmatprep.subr.mxu0 0.0
      %622 = vmatpush1.msra.mxu0 0.0
      %623 = vmatprep.mubr.f32.mxu0 0.0
      %624 = vmatmul.mubr.f32.gmra.mrb[0].mxu0 %v550
      %v625 = vpop.f32.mrb[0].mxu0
      %v626 = vadd.f32 0.0, %v625
      %v627 = vpop.f32.mrb[0].mxu0
      %v628 = vadd.f32 0.0, %v627
      %629 = vdwg.mxu0
      %v630 = vld [vmem:[%s2] sm:$0xff]
      %632 = vset.pattern.permute.xlu0 0
      %633 = vperm.xlu0 %632, %v630
      %v634 = vpop.permute.xlu0 %633
      %v636 = vmul.f32 %v626, %v634
      %v637 = vmul.f32 %v628, %v634
      %v638 = vld [vmem:[%s3] sm:$0xff]
      %640 = vset.pattern.permute.xlu0 0
      %641 = vperm.xlu0 %640, %v638
      %v642 = vpop.permute.xlu0 %641
      %v644 = vadd.f32 %v636, %v642
      %v645 = vadd.f32 %v637, %v642
      %v646 = vmax.f32 %v644, 0.0
      %v647 = vmax.f32 %v645, 0.0
      %648 = vst [vmem:[#allocation3 + $0x8] sm:$0xff] %v646
      %649 = vst [vmem:[#allocation3 + $0x10] sm:$0xff] %v647
      %v650 = vld [vmem:[#allocation3] sm:$0xff]
      %v651 = vld [vmem:[#allocation3 + $0x8] sm:$0xff]
      %v652 = vld [vmem:[#allocation3 + $0x10] sm:$0xff]
      %653 = vrot.lane.b32.xlu0 %v319, 111
      %v654 = vpop.permute.xlu0 %653
      %655 = vrot.lane.b32.xlu0 %v323, 111
      %v656 = vpop.permute.xlu0 %655
      %v657 = vsel %vm339, %v654, %v656
      %v661 = vmul.f32 %v650, %v654
      %v662 = vmul.f32 %v651, %v657
      %v663 = vmul.f32 %v652, %v656
      %667 = vrot.lane.b32.xlu0 %v661, 17
      %v668 = vpop.permute.xlu0 %667
      %669 = vrot.lane.b32.xlu0 %v662, 17
      %v670 = vpop.permute.xlu0 %669
      %671 = vrot.lane.b32.xlu0 %v663, 17
      %v672 = vpop.permute.xlu0 %671
      %v673 = vsel %vm354, %v668, %v670
      %v674 = vsel %vm354, %v670, %v672
      %677 = vst [vmem:[#allocation5] sm:$0xff] %v673
      %678 = vst [vmem:[#allocation5 + $0x8] sm:$0xff] %v674
      %v679 = vld [vmem:[#allocation3] sm:$0xff]
      %v680 = vld [vmem:[#allocation3 + $0x8] sm:$0xff]
      %v681 = vld [vmem:[#allocation3 + $0x10] sm:$0xff]
      %685 = vrot.lane.b32.xlu0 %v679, 16
      %v686 = vpop.permute.xlu0 %685
      %687 = vrot.lane.b32.xlu0 %v680, 16
      %v688 = vpop.permute.xlu0 %687
      %689 = vrot.lane.b32.xlu0 %v681, 16
      %v690 = vpop.permute.xlu0 %689
      %v691 = vsel %vm373, %v686, %v688
      %v692 = vsel %vm373, %v688, %v690
      %695 = vst [vmem:[#allocation5 + $0x10] sm:$0xff] %v691
      %696 = vst [vmem:[#allocation5 + $0x18] sm:$0xff] %v692
      %v697 = vld [vmem:[#allocation3] sm:$0xff]
      %v698 = vld [vmem:[#allocation3 + $0x8] sm:$0xff]
      %v699 = vld [vmem:[#allocation3 + $0x10] sm:$0xff]
      %700 = vrot.lane.b32.xlu0 %v328, 113
      %v701 = vpop.permute.xlu0 %700
      %702 = vrot.lane.b32.xlu0 %v332, 113
      %v703 = vpop.permute.xlu0 %702
      %v704 = vsel %vm386, %v701, %v703
      %v708 = vmul.f32 %v697, %v701
      %v709 = vmul.f32 %v698, %v704
      %v710 = vmul.f32 %v699, %v703
      %714 = vrot.lane.b32.xlu0 %v708, 15
      %v715 = vpop.permute.xlu0 %714
      %716 = vrot.lane.b32.xlu0 %v709, 15
      %v717 = vpop.permute.xlu0 %716
      %718 = vrot.lane.b32.xlu0 %v710, 15
      %v719 = vpop.permute.xlu0 %718
      %v720 = vsel %vm401, %v715, %v717
      %v721 = vsel %vm401, %v717, %v719
      %724 = vst [vmem:[#allocation5 + $0x20] sm:$0xff] %v720
      %725 = vst [vmem:[#allocation5 + $0x28] sm:$0xff] %v721
      %v726 = vld [vmem:[#allocation3] sm:$0xff]
      %v727 = vld [vmem:[#allocation3 + $0x8] sm:$0xff]
      %v728 = vld [vmem:[#allocation3 + $0x10] sm:$0xff]
      %729 = vrot.lane.b32.xlu0 %v319, 127
      %v730 = vpop.permute.xlu0 %729
      %731 = vrot.lane.b32.xlu0 %v323, 127
      %v732 = vpop.permute.xlu0 %731
      %v733 = vsel %vm413, %v730, %v732
      %v737 = vmul.f32 %v726, %v730
      %v738 = vmul.f32 %v727, %v733
      %v739 = vmul.f32 %v728, %v732
      %743 = vrot.lane.b32.xlu0 %v737, 1
      %v744 = vpop.permute.xlu0 %743
      %745 = vrot.lane.b32.xlu0 %v738, 1
      %v746 = vpop.permute.xlu0 %745
      %747 = vrot.lane.b32.xlu0 %v739, 1
      %v748 = vpop.permute.xlu0 %747
      %v749 = vsel %vm429, %v744, %v746
      %v750 = vsel %vm429, %v746, %v748
      %753 = vst [vmem:[#allocation5 + $0x30] sm:$0xff] %v749
      %754 = vst [vmem:[#allocation5 + $0x38] sm:$0xff] %v750
      %v755 = vld [vmem:[#allocation3 + $0x8] sm:$0xff]
      %v756 = vld [vmem:[#allocation3 + $0x10] sm:$0xff]
      %757 = vst [vmem:[#allocation5 + $0x40] sm:$0xff] %v755
      %758 = vst [vmem:[#allocation5 + $0x48] sm:$0xff] %v756
      %v759 = vld [vmem:[#allocation3 + $0x8] sm:$0xff]
      %v760 = vld [vmem:[#allocation3 + $0x10] sm:$0xff]
      %v761 = vld [vmem:[#allocation3 + $0x18] sm:$0xff]
      %762 = vrot.lane.b32.xlu0 %v328, 1
      %v763 = vpop.permute.xlu0 %762
      %764 = vrot.lane.b32.xlu0 %v332, 1
      %v765 = vpop.permute.xlu0 %764
      %v766 = vsel %vm429, %v763, %v765
      %v770 = vmul.f32 %v759, %v763
      %v771 = vmul.f32 %v760, %v766
      %v772 = vmul.f32 %v761, %v765
      %776 = vrot.lane.b32.xlu0 %v770, 127
      %v777 = vpop.permute.xlu0 %776
      %778 = vrot.lane.b32.xlu0 %v771, 127
      %v779 = vpop.permute.xlu0 %778
      %780 = vrot.lane.b32.xlu0 %v772, 127
      %v781 = vpop.permute.xlu0 %780
      %v782 = vsel %vm413, %v777, %v779
      %v783 = vsel %vm413, %v779, %v781
      %786 = vst [vmem:[#allocation5 + $0x50] sm:$0xff] %v782
      %787 = vst [vmem:[#allocation5 + $0x58] sm:$0xff] %v783
      %v788 = vld [vmem:[#allocation3 + $0x8] sm:$0xff]
      %v789 = vld [vmem:[#allocation3 + $0x10] sm:$0xff]
      %v790 = vld [vmem:[#allocation3 + $0x18] sm:$0xff]
      %791 = vrot.lane.b32.xlu0 %v319, 15
      %v792 = vpop.permute.xlu0 %791
      %793 = vrot.lane.b32.xlu0 %v323, 15
      %v794 = vpop.permute.xlu0 %793
      %v795 = vsel %vm401, %v792, %v794
      %v799 = vmul.f32 %v788, %v792
      %v800 = vmul.f32 %v789, %v795
      %v801 = vmul.f32 %v790, %v794
      %805 = vrot.lane.b32.xlu0 %v799, 113
      %v806 = vpop.permute.xlu0 %805
      %807 = vrot.lane.b32.xlu0 %v800, 113
      %v808 = vpop.permute.xlu0 %807
      %809 = vrot.lane.b32.xlu0 %v801, 113
      %v810 = vpop.permute.xlu0 %809
      %v811 = vsel %vm386, %v806, %v808
      %v812 = vsel %vm386, %v808, %v810
      %815 = vst [vmem:[#allocation5 + $0x60] sm:$0xff] %v811
      %816 = vst [vmem:[#allocation5 + $0x68] sm:$0xff] %v812
      %v817 = vld [vmem:[#allocation3 + $0x8] sm:$0xff]
      %v818 = vld [vmem:[#allocation3 + $0x10] sm:$0xff]
      %v819 = vld [vmem:[#allocation3 + $0x18] sm:$0xff]
      %823 = vrot.lane.b32.xlu0 %v817, 112
      %v824 = vpop.permute.xlu0 %823
      %825 = vrot.lane.b32.xlu0 %v818, 112
      %v826 = vpop.permute.xlu0 %825
      %827 = vrot.lane.b32.xlu0 %v819, 112
      %v828 = vpop.permute.xlu0 %827
      %v829 = vsel %vm505, %v824, %v826
      %v830 = vsel %vm505, %v826, %v828
      %833 = vst [vmem:[#allocation5 + $0x70] sm:$0xff] %v829
      %834 = vst [vmem:[#allocation5 + $0x78] sm:$0xff] %v830
      %v835 = vld [vmem:[#allocation3 + $0x8] sm:$0xff]
      %v836 = vld [vmem:[#allocation3 + $0x10] sm:$0xff]
      %v837 = vld [vmem:[#allocation3 + $0x18] sm:$0xff]
      %838 = vrot.lane.b32.xlu0 %v328, 17
      %v839 = vpop.permute.xlu0 %838
      %840 = vrot.lane.b32.xlu0 %v332, 17
      %v841 = vpop.permute.xlu0 %840
      %v842 = vsel %vm354, %v839, %v841
      %v846 = vmul.f32 %v835, %v839
      %v847 = vmul.f32 %v836, %v842
      %v848 = vmul.f32 %v837, %v841
      %852 = vrot.lane.b32.xlu0 %v846, 111
      %v853 = vpop.permute.xlu0 %852
      %854 = vrot.lane.b32.xlu0 %v847, 111
      %v855 = vpop.permute.xlu0 %854
      %856 = vrot.lane.b32.xlu0 %v848, 111
      %v857 = vpop.permute.xlu0 %856
      %v858 = vsel %vm339, %v853, %v855
      %v859 = vsel %vm339, %v855, %v857
      %862 = vst [vmem:[#allocation5 + $0x80] sm:$0xff] %v858
      %863 = vst [vmem:[#allocation5 + $0x88] sm:$0xff] %v859
      %v864 = vld [vmem:[%s4] sm:$0xff]
      %v865 = vld [vmem:[#allocation5] sm:$0xff]
      %v866 = vld [vmem:[#allocation5 + $0x8] sm:$0xff]
      %v867 = vld [vmem:[#allocation5 + $0x10] sm:$0xff]
      %v868 = vld [vmem:[#allocation5 + $0x18] sm:$0xff]
      %v869 = vld [vmem:[#allocation5 + $0x20] sm:$0xff]
      %v870 = vld [vmem:[#allocation5 + $0x28] sm:$0xff]
      %v871 = vld [vmem:[#allocation5 + $0x30] sm:$0xff]
      %v872 = vld [vmem:[#allocation5 + $0x38] sm:$0xff]
      %v873 = vld [vmem:[#allocation5 + $0x40] sm:$0xff]
      %v874 = vld [vmem:[#allocation5 + $0x48] sm:$0xff]
      %v875 = vld [vmem:[#allocation5 + $0x50] sm:$0xff]
      %v876 = vld [vmem:[#allocation5 + $0x58] sm:$0xff]
      %v877 = vld [vmem:[#allocation5 + $0x60] sm:$0xff]
      %v878 = vld [vmem:[#allocation5 + $0x68] sm:$0xff]
      %v879 = vld [vmem:[#allocation5 + $0x70] sm:$0xff]
      %v880 = vld [vmem:[#allocation5 + $0x78] sm:$0xff]
      %v881 = vld [vmem:[#allocation5 + $0x80] sm:$0xff]
      %v882 = vld [vmem:[#allocation5 + $0x88] sm:$0xff]
      %vm883 = vcmask 588800
      %v885 = vsel %vm883, %v864, 0
      %887 = vmatprep.subr.mxu0 %v866
      %888 = vmatpush1.msra.mxu0 %v865
      %889 = vmatprep.subr.mxu0 %v868
      %890 = vmatpush1.msra.mxu0 %v867
      %891 = vmatprep.subr.mxu0 %v870
      %892 = vmatpush1.msra.mxu0 %v869
      %893 = vmatprep.subr.mxu0 %v872
      %894 = vmatpush1.msra.mxu0 %v871
      %895 = vmatprep.subr.mxu0 %v874
      %896 = vmatpush1.msra.mxu0 %v873
      %897 = vmatprep.subr.mxu0 %v876
      %898 = vmatpush1.msra.mxu0 %v875
      %899 = vmatprep.subr.mxu0 %v878
      %900 = vmatpush1.msra.mxu0 %v877
      %901 = vmatprep.subr.mxu0 %v880
      %902 = vmatpush1.msra.mxu0 %v879
      %903 = vmatprep.subr.mxu0 %v882
      %904 = vmatpush1.msra.mxu0 %v881
      %905 = vmatprep.subr.mxu0 0.0
      %906 = vmatpush1.msra.mxu0 0.0
      %907 = vmatprep.subr.mxu0 0.0
      %908 = vmatpush1.msra.mxu0 0.0
      %909 = vmatprep.subr.mxu0 0.0
      %910 = vmatpush1.msra.mxu0 0.0
      %911 = vmatprep.subr.mxu0 0.0
      %912 = vmatpush1.msra.mxu0 0.0
      %913 = vmatprep.subr.mxu0 0.0
      %914 = vmatpush1.msra.mxu0 0.0
      %915 = vmatprep.subr.mxu0 0.0
      %916 = vmatpush1.msra.mxu0 0.0
      %917 = vmatprep.subr.mxu0 0.0
      %918 = vmatpush1.msra.mxu0 0.0
      %919 = vmatprep.subr.mxu0 0.0
      %920 = vmatpush1.msra.mxu0 0.0
      %921 = vmatprep.subr.mxu0 0.0
      %922 = vmatpush1.msra.mxu0 0.0
      %923 = vmatprep.subr.mxu0 0.0
      %924 = vmatpush1.msra.mxu0 0.0
      %925 = vmatprep.subr.mxu0 0.0
      %926 = vmatpush1.msra.mxu0 0.0
      %927 = vmatprep.subr.mxu0 0.0
      %928 = vmatpush1.msra.mxu0 0.0
      %929 = vmatprep.subr.mxu0 0.0
      %930 = vmatpush1.msra.mxu0 0.0
      %931 = vmatprep.subr.mxu0 0.0
      %932 = vmatpush1.msra.mxu0 0.0
      %933 = vmatprep.subr.mxu0 0.0
      %934 = vmatpush1.msra.mxu0 0.0
      %935 = vmatprep.subr.mxu0 0.0
      %936 = vmatpush1.msra.mxu0 0.0
      %937 = vmatprep.subr.mxu0 0.0
      %938 = vmatpush1.msra.mxu0 0.0
      %939 = vmatprep.subr.mxu0 0.0
      %940 = vmatpush1.msra.mxu0 0.0
      %941 = vmatprep.subr.mxu0 0.0
      %942 = vmatpush1.msra.mxu0 0.0
      %943 = vmatprep.subr.mxu0 0.0
      %944 = vmatpush1.msra.mxu0 0.0
      %945 = vmatprep.subr.mxu0 0.0
      %946 = vmatpush1.msra.mxu0 0.0
      %947 = vmatprep.subr.mxu0 0.0
      %948 = vmatpush1.msra.mxu0 0.0
      %949 = vmatprep.subr.mxu0 0.0
      %950 = vmatpush1.msra.mxu0 0.0
      %951 = vmatprep.mubr.f32.mxu0 0.0
      %952 = vmatmul.mubr.f32.gmra.mrb[0].mxu0 %v885
      %v953 = vpop.f32.mrb[0].mxu0
      %v954 = vadd.f32 0.0, %v953
      %v955 = vpop.f32.mrb[0].mxu0
      %v956 = vadd.f32 0.0, %v955
      %957 = vdwg.mxu0
      %v958 = vld [vmem:[%s5] sm:$0xff]
      %960 = vset.pattern.permute.xlu0 0
      %961 = vperm.xlu0 %960, %v958
      %v962 = vpop.permute.xlu0 %961
      %v964 = vmul.f32 %v954, %v962
      %v965 = vmul.f32 %v956, %v962
      %v966 = vld [vmem:[%s6] sm:$0xff]
      %968 = vset.pattern.permute.xlu0 0
      %969 = vperm.xlu0 %968, %v966
      %v970 = vpop.permute.xlu0 %969
      %v972 = vadd.f32 %v964, %v970
      %v973 = vadd.f32 %v965, %v970
      %v974 = vmax.f32 %v972, 0.0
      %v975 = vmax.f32 %v973, 0.0
      %976 = vst [vmem:[%s305] sm:$0xff] %v974
      %977 = vst [vmem:[%s305 + $0x8] sm:$0xff] %v975
      %p978 = scmp.lt.s32.totalorder %s19, 1
      %s979 = scalar_select %p978, %s19, 1
      %s980 = smul.addr %s979, 2
      %s981 = smul.addr %s980, 8
      %s982 = scalar_lea.vmem %s8, %s981
      // Predicated region
      $region53: #{conv_block_pallas.1} parent=51 // pred_check
        %p983 = pneg %p210
      $region54: #{conv_block_pallas.1} parent=51 // pred_check_branch
        %985 = sbr.rel (%p983) target = $region56
      $region55: #{conv_block_pallas.1} parent=51 // pred_region
        _
      $region56: #{conv_block_pallas.1} parent=51 // pred_fallthru
        _
    $region52: #{conv_block_pallas.1} parent=5 // pred_fallthru
      _
    %p986 = scmp.le.s32.totalorder 2, %s14
    // Predicated region
    $region57: #{conv_block_pallas.1} parent=5 // pred_check
      %p987 = pneg %p986
    $region58: #{conv_block_pallas.1} parent=5 // pred_check_branch
      %989 = sbr.rel (%p987) target = $region60
    $region59: #{conv_block_pallas.1} parent=5 // pred_region
      %s990 = ssub.s32 %s14, 2
      // Predicated region
      $region61: #{conv_block_pallas.1} parent=59 // pred_check
        %p991 = pneg %p216
      $region62: #{conv_block_pallas.1} parent=59 // pred_check_branch
        %993 = sbr.rel (%p991) target = $region64
      $region63: #{conv_block_pallas.1} parent=59 // pred_region
        %p994 = scmp.lt.s32.totalorder %s20, 1
        %s995 = scalar_select %p994, %s20, 1
        %s996 = smul.addr %s995, 2
        %s997 = smul.addr %s996, 8
        %s998 = scalar_lea.vmem %s8, %s997
      $region64: #{conv_block_pallas.1} parent=59 // pred_fallthru
        _
    $region60: #{conv_block_pallas.1} parent=5 // pred_fallthru
      _
  $region6: #{conv_block_pallas.1} parent=0 // loop_footer
    %s18 = sadd.s32 1, %s14
  $region7: #{conv_block_pallas.1} parent=0 // loop_footer_branch
    %13 = sbr.rel target = $region3
  $region8: #{conv_block_pallas.1} parent=0 // loop_exit
    _

</llo_original>
